<compile_context>
chip_gen: v7x
topology: tpu7x:2x2x1
jax: 0.10.0
libtpu: 0.0.40
codegen_flags: <defaults>
</compile_context>

<pallas_src>
import functools

import jax
import jax.numpy as jnp
from jax.experimental import pallas as pl
from jax.experimental.pallas import tpu as pltpu


def _round_up(x, m):
    return (x + m - 1) // m * m


def _pick_row_tiling(M, *, tm_max, min_programs=4):
    """Balanced row tiles: tm is a multiple of 8, grid has >= min_programs steps."""
    n = max(pl.cdiv(M, tm_max), min_programs)
    n = max(min(n, pl.cdiv(M, 8)), 1)        # never split below one sublane group
    tm = _round_up(pl.cdiv(M, n), 8)
    n = pl.cdiv(M, tm)
    return tm, n


# ----------------------------------------------------------------------------
# Folded (affine) path: one dot per row tile.
# ----------------------------------------------------------------------------
def _folded_embed_kernel(p_ref, w_ref, b_ref, o_ref):
    # p_ref: (tm, K) bf16 | w_ref: (K, E_pad) bf16 | b_ref: (1, E_pad) f32
    acc = jnp.dot(p_ref[...], w_ref[...], preferred_element_type=jnp.float32)
    o_ref[...] = (acc + b_ref[...]).astype(o_ref.dtype)


def folded_patch_embed(patches, w_fused, b_fused, *, out_dtype=jnp.bfloat16,
                       tm_max=1024):
    """out = patches @ W_fused + b_fused, streamed over balanced row tiles."""
    M, K = patches.shape
    E = w_fused.shape[1]

    K_pad = _round_up(K, 16)      # bf16 sublane pack for the resident weight
    E_pad = _round_up(E, 128)     # lane-dense (unmasked) output stores
    tm, n_m = _pick_row_tiling(M, tm_max=tm_max)
    M_pad = tm * n_m

    p = jnp.pad(patches.astype(jnp.bfloat16), ((0, M_pad - M), (0, K_pad - K)))
    w = jnp.pad(w_fused.astype(jnp.bfloat16), ((0, K_pad - K), (0, E_pad - E)))
    b = jnp.pad(b_fused.astype(jnp.float32), ((0, E_pad - E),)).reshape(1, E_pad)

    out_bytes = jnp.dtype(out_dtype).itemsize
    vmem_need = (2 * tm * K_pad * 2            # patch tile (bf16, double-buffered)
                 + 2 * K_pad * E_pad * 2       # fused weight (tiny after the fold)
                 + 2 * E_pad * 4               # fused bias
                 + 2 * tm * E_pad * out_bytes)  # output tile
    vmem_limit = int(max(4 << 20, min(2 * vmem_need + (2 << 20), 48 << 20)))

    cost = pl.CostEstimate(
        flops=2 * M_pad * K_pad * E_pad,
        transcendentals=0,
        bytes_accessed=(p.size * 2 + w.size * 2 + b.size * 4
                        + M_pad * E_pad * out_bytes),
    )

    out = pl.pallas_call(
        _folded_embed_kernel,
        out_shape=jax.ShapeDtypeStruct((M_pad, E_pad), out_dtype),
        grid=(n_m,),
        in_specs=[
            pl.BlockSpec((tm, K_pad), lambda i: (i, 0)),     # activation row tile
            pl.BlockSpec((K_pad, E_pad), lambda i: (0, 0)),  # resident fused weight
            pl.BlockSpec((1, E_pad), lambda i: (0, 0)),      # resident fused bias
        ],
        out_specs=pl.BlockSpec((tm, E_pad), lambda i: (i, 0)),
        compiler_params=pltpu.CompilerParams(
            dimension_semantics=("parallel",),
            vmem_limit_bytes=vmem_limit,
        ),
        cost_estimate=cost,
    )(p, w, b)

    return out[:M, :E]


# ----------------------------------------------------------------------------
# Two-stage path (kept for a future nonlinear backbone): F tiled on the grid,
# f32 accumulator resident in VMEM, feat never materialized at full F width.
# ----------------------------------------------------------------------------
def _two_stage_embed_kernel(p_ref, wb_ref, bb_ref, wp_ref, pb_ref, o_ref, acc_ref):
    j = pl.program_id(1)

    @pl.when(j == 0)
    def _():
        acc_ref[...] = jnp.zeros_like(acc_ref)

    feat = jnp.dot(p_ref[...], wb_ref[...], preferred_element_type=jnp.float32)
    feat = feat + bb_ref[...]
    # TODO(synk): a real CNN backbone's nonlinearity would be applied to `feat`
    # here; the affine stand-in needs none.
    acc_ref[...] += jnp.dot(feat.astype(jnp.bfloat16), wp_ref[...],
                            preferred_element_type=jnp.float32)

    @pl.when(j == pl.num_programs(1) - 1)
    def _():
        o_ref[...] = (acc_ref[...] + pb_ref[...]).astype(o_ref.dtype)


def two_stage_patch_embed(patches, backbone_w, backbone_b, proj_w, proj_b, *,
                          out_dtype=jnp.bfloat16, tm_max=512, tf_max=256):
    M, K = patches.shape
    F = backbone_w.shape[1]
    E = proj_w.shape[1]

    K_pad = _round_up(K, 16)
    E_pad = _round_up(E, 128)
    # Tile F on the grid so the f32 feat working set stays (tm, tf), not (tm, F).
    F128 = _round_up(F, 128)
    n_f = pl.cdiv(F128, tf_max)
    tf = _round_up(pl.cdiv(F128, n_f), 128)
    F_pad = n_f * tf
    tm, n_m = _pick_row_tiling(M, tm_max=tm_max)
    M_pad = tm * n_m

    p = jnp.pad(patches.astype(jnp.bfloat16), ((0, M_pad - M), (0, K_pad - K)))
    wb = jnp.pad(backbone_w.astype(jnp.bfloat16), ((0, K_pad - K), (0, F_pad - F)))
    bb = jnp.pad(backbone_b.astype(jnp.float32), ((0, F_pad - F),)).reshape(1, F_pad)
    wp = jnp.pad(proj_w.astype(jnp.bfloat16), ((0, F_pad - F), (0, E_pad - E)))
    pb = jnp.pad(proj_b.astype(jnp.float32), ((0, E_pad - E),)).reshape(1, E_pad)

    out_bytes = jnp.dtype(out_dtype).itemsize
    vmem_need = (2 * tm * K_pad * 2 + 2 * K_pad * tf * 2 + 2 * tf * 4
                 + 2 * tf * E_pad * 2 + 2 * E_pad * 4
                 + 2 * tm * E_pad * out_bytes
                 + tm * E_pad * 4            # f32 accumulator scratch
                 + tm * tf * 4)              # feat working set / spill slack
    vmem_limit = int(max(4 << 20, min(2 * vmem_need + (2 << 20), 48 << 20)))

    cost = pl.CostEstimate(
        flops=2 * M_pad * K_pad * F_pad + 2 * M_pad * F_pad * E_pad,
        transcendentals=0,
        bytes_accessed=(p.size * 2 + wb.size * 2 + wp.size * 2 + bb.size * 4
                        + pb.size * 4 + M_pad * E_pad * out_bytes),
    )

    out = pl.pallas_call(
        _two_stage_embed_kernel,
        out_shape=jax.ShapeDtypeStruct((M_pad, E_pad), out_dtype),
        grid=(n_m, n_f),
        in_specs=[
            pl.BlockSpec((tm, K_pad), lambda i, j: (i, 0)),
            pl.BlockSpec((K_pad, tf), lambda i, j: (0, j)),
            pl.BlockSpec((1, tf), lambda i, j: (0, j)),
            pl.BlockSpec((tf, E_pad), lambda i, j: (j, 0)),
            pl.BlockSpec((1, E_pad), lambda i, j: (0, 0)),
        ],
        out_specs=pl.BlockSpec((tm, E_pad), lambda i, j: (i, 0)),
        scratch_shapes=[pltpu.VMEM((tm, E_pad), jnp.float32)],
        compiler_params=pltpu.CompilerParams(
            dimension_semantics=("parallel", "arbitrary"),
            vmem_limit_bytes=vmem_limit,
        ),
        cost_estimate=cost,
    )(p, wb, bb, wp, pb)

    return out[:M, :E]


# ----------------------------------------------------------------------------
# HybridEmbed forward.
# ----------------------------------------------------------------------------
def _extract_patches(x_nchw):
    """NCHW -> (B*Hf*Wf, 4*C) flattened 2x2 stride-2 patches, in bf16.

    Single XLA transpose (no NHWC intermediate). Patch feature order is
    (dy, dx, c), matching the synthetic backbone weight layout below.
    """
    B, C, H, W = x_nchw.shape
    Hf, Wf = H // 2, W // 2
    patches = (x_nchw.astype(jnp.bfloat16)
               .reshape(B, C, Hf, 2, Wf, 2)
               .transpose(0, 2, 4, 3, 5, 1)
               .reshape(B * Hf * Wf, 4 * C))
    return patches, (B, Hf, Wf)


# TODO(synk): the reference takes an arbitrary nn.Module CNN backbone; only a
# 2x2 stride-2 patchify-conv stand-in is implemented here (arbitrary backbones
# have no generic Pallas translation).
# TODO(synk): the patch extraction could be folded into the kernel's input DMA
# (even/odd-row weight split + strided views of the raw activation) to save one
# activation round-trip through HBM; kept as one XLA transpose for robustness.
@functools.partial(jax.jit, static_argnames=("fold_affine", "out_dtype"))
def hybrid_embed_forward(x_nchw, params, *, fold_affine=True, out_dtype=jnp.bfloat16):
    patches, (B, Hf, Wf) = _extract_patches(x_nchw)
    embed_dim = params["proj_w"].shape[1]

    if fold_affine:
        # Stand-in backbone is purely affine -> fold both stages into one
        # matmul: out = patches @ (Wb @ Wp) + (bb @ Wp + pb).
        wb = params["backbone_w"].astype(jnp.float32)
        wp = params["proj_w"].astype(jnp.float32)
        w_fused = wb @ wp
        b_fused = params["backbone_b"].astype(jnp.float32) @ wp + params["proj_b"]
        out = folded_patch_embed(patches, w_fused, b_fused, out_dtype=out_dtype)
    else:
        out = two_stage_patch_embed(
            patches, params["backbone_w"], params["backbone_b"],
            params["proj_w"], params["proj_b"], out_dtype=out_dtype)

    return out.reshape(B, Hf * Wf, embed_dim)   # (B, num_patches, embed_dim)


# ----------------------------------------------------------------------------
# Deterministic parameter setup + pure-JAX f32 reference.
# ----------------------------------------------------------------------------
def init_params(key, in_chans, feature_dim, embed_dim):
    k1, k2, k3, k4 = jax.random.split(key, 4)
    return {
        # backbone patchify conv: (2*2*in_chans, feature_dim), row order (dy,dx,c)
        "backbone_w": jax.random.normal(k1, (2 * 2 * in_chans, feature_dim), jnp.float32) * 0.05,
        "backbone_b": jax.random.normal(k2, (feature_dim,), jnp.float32) * 0.05,
        # proj 1x1 conv: (feature_dim, embed_dim)  (== PyTorch weight[E,C,1,1].T)
        "proj_w": jax.random.normal(k3, (feature_dim, embed_dim), jnp.float32) * 0.05,
        "proj_b": jax.random.normal(k4, (embed_dim,), jnp.float32) * 0.05,
    }


def reference_forward(x_nchw, params):
    B, C, H, W = x_nchw.shape
    Hf, Wf = H // 2, W // 2
    patches = (x_nchw.astype(jnp.float32)
               .reshape(B, C, Hf, 2, Wf, 2)
               .transpose(0, 2, 4, 3, 5, 1)
               .reshape(B * Hf * Wf, 4 * C))
    feat = patches @ params["backbone_w"] + params["backbone_b"]
    out = feat @ params["proj_w"] + params["proj_b"]
    return out.reshape(B, Hf * Wf, -1)


if __name__ == "__main__":
    key = jax.random.PRNGKey(0)
    k_x, k_p = jax.random.split(key)

    B, in_chans, img = 2, 4, 16
    feature_dim, embed_dim = 32, 64

    x = jax.random.normal(k_x, (B, in_chans, img, img), jnp.float32)  # NCHW input
    params = init_params(k_p, in_chans, feature_dim, embed_dim)

    ref = reference_forward(x, params)

    # Primary (folded, single-matmul) path.
    out = hybrid_embed_forward(x, params)
    out = jax.block_until_ready(out)
    assert out.shape == (B, (img // 2) * (img // 2), embed_dim), out.shape
    # bf16 MXU inputs / bf16 output vs pure-f32 reference.
    assert jnp.allclose(out.astype(jnp.float32), ref, atol=2e-2, rtol=2e-2), \
        "folded path mismatch vs reference"

    # Two-stage path kept for (future) nonlinear backbones.
    out2 = hybrid_embed_forward(x, params, fold_affine=False)
    out2 = jax.block_until_ready(out2)
    assert jnp.allclose(out2.astype(jnp.float32), ref, atol=2e-2, rtol=2e-2), \
        "two-stage path mismatch vs reference"

    print("KERNEL_OK")
</pallas_src>

<mosaic_0001>
module attributes {stable_mosaic.version = 11 : i64} {
  func.func @_folded_embed_kernel(%arg0: i32, %arg1: memref<32x16xbf16, #tpu.memory_space<vmem>>, %arg2: memref<16x128xbf16, #tpu.memory_space<vmem>>, %arg3: memref<1x128xf32, #tpu.memory_space<vmem>>, %arg4: memref<32x128xbf16, #tpu.memory_space<vmem>>) attributes {dimension_semantics = [#tpu.dimension_semantics<parallel>], iteration_bounds = array<i64: 4>, scalar_prefetch = 0 : i64, scratch_operands = 0 : i64, tpu.core_type = #tpu.core_type<tc>, window_params = [{transform_indices = @transform_0, window_bounds = array<i64: 32, 16>}, {pipeline_mode = #tpu.pipeline_mode<synchronous>, transform_indices = @transform_1, window_bounds = array<i64: 16, 128>}, {pipeline_mode = #tpu.pipeline_mode<synchronous>, transform_indices = @transform_2, window_bounds = array<i64: 1, 128>}, {transform_indices = @transform_3, window_bounds = array<i64: 32, 128>}]} {
    %c0 = arith.constant 0 : index
    %c0_0 = arith.constant 0 : index
    %0 = vector.load %arg1[%c0, %c0_0] : memref<32x16xbf16, #tpu.memory_space<vmem>>, vector<32x16xbf16>
    %c0_1 = arith.constant 0 : index
    %c0_2 = arith.constant 0 : index
    %1 = vector.load %arg2[%c0_1, %c0_2] : memref<16x128xbf16, #tpu.memory_space<vmem>>, vector<16x128xbf16>
    %cst = arith.constant dense<0.000000e+00> : vector<32x128xf32>
    %2 = tpu.matmul %0, %1, %cst {dimension_numbers = #tpu.dot_dimension_numbers<[1], [0], [0], [1], [0, 0, 1, 1], [], []>} : vector<32x16xbf16>, vector<16x128xbf16>, vector<32x128xf32> -> vector<32x128xf32>
    %c0_3 = arith.constant 0 : index
    %c0_4 = arith.constant 0 : index
    %3 = vector.load %arg3[%c0_3, %c0_4] : memref<1x128xf32, #tpu.memory_space<vmem>>, vector<1x128xf32>
    %4 = vector.broadcast %3 : vector<1x128xf32> to vector<32x128xf32>
    %5 = arith.addf %2, %4 : vector<32x128xf32>
    %6 = arith.truncf %5 : vector<32x128xf32> to vector<32x128xbf16>
    %c0_5 = arith.constant 0 : index
    %c0_6 = arith.constant 0 : index
    %7 = vector.load %arg4[%c0_5, %c0_6] : memref<32x128xbf16, #tpu.memory_space<vmem>>, vector<32x128xbf16>
    tpu.vector_store %arg4[%c0_5, %c0_6], %6 {strides = array<i32>} : memref<32x128xbf16, #tpu.memory_space<vmem>>, vector<32x128xbf16>,
    return
  }
  func.func @transform_0(%arg0: i32) -> (i32, i32) {
    %c0_i32 = arith.constant 0 : i32
    %c0_i32_0 = arith.constant 0 : i32
    return %arg0, %c0_i32 : i32, i32
  }
  func.func @transform_1(%arg0: i32) -> (i32, i32) {
    %c0_i32 = arith.constant 0 : i32
    %c0_i32_0 = arith.constant 0 : i32
    %c0_i32_1 = arith.constant 0 : i32
    return %c0_i32, %c0_i32_0 : i32, i32
  }
  func.func @transform_2(%arg0: i32) -> (i32, i32) {
    %c0_i32 = arith.constant 0 : i32
    %c0_i32_0 = arith.constant 0 : i32
    %c0_i32_1 = arith.constant 0 : i32
    return %c0_i32, %c0_i32_0 : i32, i32
  }
  func.func @transform_3(%arg0: i32) -> (i32, i32) {
    %c0_i32 = arith.constant 0 : i32
    %c0_i32_0 = arith.constant 0 : i32
    return %arg0, %c0_i32 : i32, i32
  }
}

</mosaic_0001>

<llo_original>
// kernel: hybrid_embed_forward.1
$region0: #{hybrid_embed_forward.1}
  #allocation0 [shape = 'u32[]', space=smem, size = 0x4, offset = 0x4, fixed_abs, tag = 'smem constant byte address 0x4 - core index']
  #allocation1 [shape = 'u32[144,128]{1,0:T(1,128)}', space=vmem, size = 0x12000, scoped, tag = 'internal scratch']
  %s0 = inlined_call_operand.vmem [shape: bf16[128,16], index: 0, kind: input, shape index: {}]
  %s1 = inlined_call_operand.vmem [shape: bf16[16,128], index: 1, kind: input, shape index: {}]
  %s2 = inlined_call_operand.vmem [shape: f32[1,128], index: 2, kind: input, shape index: {}]
  %s3 = inlined_call_operand.hbm [shape: bf16[128,128], index: 3, kind: output, shape index: {}]
  %s4 = sld [smem:[#allocation0]]
  $region45: #{hybrid_embed_forward.1} parent=0
    _
  %s6 = ssub.s32 1, %s4
  %s7 = scalar_select 0, %s6, %s4
  $region1: #{hybrid_embed_forward.1} parent=0
    #allocation2 [shape = 'u8[16384]{0}', space=vmem, size = 0x4000, scoped, tag = 'output window, operand 0']
    #allocation3 [shape = 's32[2]{0}', space=sflag, size = 0x8, scoped, tag = 'scoped memory for hybrid_embed_forward.1']
    %8 = vsyncpa [#allocation3], 0
    %s9 = scalar_lea.sflag [#allocation3], 1
    %10 = vsyncpa %s9, 0
    loop: start=0, step=1, limit=6
    $region2: #{hybrid_embed_forward.1} parent=1 // loop_pre_header
      _
    $region3: #{hybrid_embed_forward.1} parent=1 // loop_header
      %s12 = sphi 0, %s16
      %p13 = scmp.ge.s32.totalorder %s12, 6
      %s22 = sphi 0, %s24
      %s25 = sphi 0, %s22
      %s26 = sphi 0, %s25
      %s42 = sphi 0, %s26
      %s46 = sphi 0, %s46
      %s48 = sphi 0, %s46
      %s49 = sphi 0, %s48
      %s63 = sphi 0, %s49
      %s67 = sphi 0, %s67
      %s69 = sphi 0, %s67
      %s70 = sphi 0, %s69
      %s84 = sphi 0, %s70
      %s90 = sphi 0, %s92
      %s93 = sphi 0, %s90
      %s94 = sphi 0, %s93
      %s110 = sphi 0, %s94
    $region4: #{hybrid_embed_forward.1} parent=1 // loop_header_branch
      %15 = sbr.rel (%p13) target = $region8
    $region5: #{hybrid_embed_forward.1} parent=1 // loop_body
      %s17 = ssub.s32 %s12, 1
      %s18 = ssub.s32 %s12, 2
      %s19 = sadd.s32 %s12, 1
      %s20 = ssub.s32 %s12, %s19
      %p21 = scmp.eq.s32.totalorder %s20, 0
      %s23 = sadd.s32 %s22, 1
      %s24 = scalar_select %p21, %s22, %s23
      %p27 = pneg %p21
      %p28 = scmp.eq.s32.totalorder %s12, 3
      %p29 = por %p27, %p28
      %p30 = scmp.ne.s32.totalorder %s22, %s25
      %p31 = scmp.eq.s32.totalorder %s12, 0
      %p32 = por %p30, %p31
      %p33 = scmp.ne.s32.totalorder %s22, %s25
      %p34 = scmp.eq.s32.totalorder %s17, 3
      %p35 = por %p33, %p34
      %p36 = scmp.ne.s32.totalorder %s25, %s26
      %p37 = scmp.eq.s32.totalorder %s17, 0
      %p38 = por %p36, %p37
      %p39 = scmp.ne.s32.totalorder %s25, %s26
      %p40 = scmp.eq.s32.totalorder %s18, 3
      %p41 = por %p39, %p40
      %p43 = scmp.ne.s32.totalorder %s26, %s42
      %p44 = scmp.eq.s32.totalorder %s18, 0
      %p45 = por %p43, %p44
      %s47 = sadd.s32 %s46, 1
      %p50 = scmp.eq.s32.totalorder %s12, 3
      %p51 = scmp.ne.s32.totalorder %s46, %s48
      %p52 = scmp.eq.s32.totalorder %s12, 0
      %p53 = por %p51, %p52
      %p54 = scmp.ne.s32.totalorder %s46, %s48
      %p55 = scmp.eq.s32.totalorder %s17, 3
      %p56 = por %p54, %p55
      %p57 = scmp.ne.s32.totalorder %s48, %s49
      %p58 = scmp.eq.s32.totalorder %s17, 0
      %p59 = por %p57, %p58
      %p60 = scmp.ne.s32.totalorder %s48, %s49
      %p61 = scmp.eq.s32.totalorder %s18, 3
      %p62 = por %p60, %p61
      %p64 = scmp.ne.s32.totalorder %s49, %s63
      %p65 = scmp.eq.s32.totalorder %s18, 0
      %p66 = por %p64, %p65
      %s68 = sadd.s32 %s67, 1
      %p71 = scmp.eq.s32.totalorder %s12, 3
      %p72 = scmp.ne.s32.totalorder %s67, %s69
      %p73 = scmp.eq.s32.totalorder %s12, 0
      %p74 = por %p72, %p73
      %p75 = scmp.ne.s32.totalorder %s67, %s69
      %p76 = scmp.eq.s32.totalorder %s17, 3
      %p77 = por %p75, %p76
      %p78 = scmp.ne.s32.totalorder %s69, %s70
      %p79 = scmp.eq.s32.totalorder %s17, 0
      %p80 = por %p78, %p79
      %p81 = scmp.ne.s32.totalorder %s69, %s70
      %p82 = scmp.eq.s32.totalorder %s18, 3
      %p83 = por %p81, %p82
      %p85 = scmp.ne.s32.totalorder %s70, %s84
      %p86 = scmp.eq.s32.totalorder %s18, 0
      %p87 = por %p85, %p86
      %s88 = ssub.s32 %s12, %s19
      %p89 = scmp.eq.s32.totalorder %s88, 0
      %s91 = sadd.s32 %s90, 1
      %s92 = scalar_select %p89, %s90, %s91
      %p95 = pneg %p89
      %p96 = scmp.eq.s32.totalorder %s12, 3
      %p97 = por %p95, %p96
      %p98 = scmp.ne.s32.totalorder %s90, %s93
      %p99 = scmp.eq.s32.totalorder %s12, 0
      %p100 = por %p98, %p99
      %p101 = scmp.ne.s32.totalorder %s90, %s93
      %p102 = scmp.eq.s32.totalorder %s17, 3
      %p103 = por %p101, %p102
      %p104 = scmp.ne.s32.totalorder %s93, %s94
      %p105 = scmp.eq.s32.totalorder %s17, 0
      %p106 = por %p104, %p105
      %p107 = scmp.ne.s32.totalorder %s93, %s94
      %p108 = scmp.eq.s32.totalorder %s18, 3
      %p109 = por %p107, %p108
      %p111 = scmp.ne.s32.totalorder %s94, %s110
      %p112 = scmp.eq.s32.totalorder %s18, 0
      %p113 = por %p111, %p112
      %p114 = scmp.le.s32.totalorder 1, %s12
      %p115 = scmp.lt.s32.totalorder %s12, 5
      %p116 = pnand %p114, %p115
      %p117 = pneg %p116
      // Predicated region
      $region9: #{hybrid_embed_forward.1} parent=5 // pred_check
        _
      $region10: #{hybrid_embed_forward.1} parent=5 // pred_check_branch
        %119 = sbr.rel (%p116) target = $region12
      $region11: #{hybrid_embed_forward.1} parent=5 // pred_region
        %s120 = ssub.s32 %s12, 1
        // Predicated region
        $region13: #{hybrid_embed_forward.1} parent=11 // pred_check
          %p121 = pneg %p59
        $region14: #{hybrid_embed_forward.1} parent=11 // pred_check_branch
          %123 = sbr.rel (%p121) target = $region16
        $region15: #{hybrid_embed_forward.1} parent=11 // pred_region
          _
        $region16: #{hybrid_embed_forward.1} parent=11 // pred_fallthru
          _
        // Predicated region
        $region17: #{hybrid_embed_forward.1} parent=11 // pred_check
          %p124 = pneg %p80
        $region18: #{hybrid_embed_forward.1} parent=11 // pred_check_branch
          %126 = sbr.rel (%p124) target = $region20
        $region19: #{hybrid_embed_forward.1} parent=11 // pred_region
          _
        $region20: #{hybrid_embed_forward.1} parent=11 // pred_fallthru
          _
      $region12: #{hybrid_embed_forward.1} parent=5 // pred_fallthru
        _
      %p127 = scmp.lt.s32.totalorder %s12, 4
      // Predicated region
      $region21: #{hybrid_embed_forward.1} parent=5 // pred_check
        %p128 = pneg %p127
      $region22: #{hybrid_embed_forward.1} parent=5 // pred_check_branch
        %130 = sbr.rel (%p128) target = $region24
      $region23: #{hybrid_embed_forward.1} parent=5 // pred_region
        // Predicated region
        $region25: #{hybrid_embed_forward.1} parent=23 // pred_check
          %p131 = pneg %p32
        $region26: #{hybrid_embed_forward.1} parent=23 // pred_check_branch
          %133 = sbr.rel (%p131) target = $region28
        $region27: #{hybrid_embed_forward.1} parent=23 // pred_region
          %s134 = smul.u32 4, %s12
          %p135 = scmp.lt.s32.totalorder %s134, 15
          %s136 = scalar_select %p135, %s134, 15
          %s137 = smul.addr %s136, 4
          %s138 = scalar_lea.vmem %s0, %s137
          %s139 = smul.u32 4, %s12
        $region28: #{hybrid_embed_forward.1} parent=23 // pred_fallthru
          _
      $region24: #{hybrid_embed_forward.1} parent=5 // pred_fallthru
        _
      %p140 = scmp.le.s32.totalorder 1, %s12
      %p141 = scmp.lt.s32.totalorder %s12, 5
      %p142 = pnand %p140, %p141
      %p143 = pneg %p142
      // Predicated region
      $region29: #{hybrid_embed_forward.1} parent=5 // pred_check
        _
      $region30: #{hybrid_embed_forward.1} parent=5 // pred_check_branch
        %145 = sbr.rel (%p142) target = $region32
      $region31: #{hybrid_embed_forward.1} parent=5 // pred_region
        %s146 = ssub.s32 %s12, 1
        %s147 = smul.u32 4, %s17
        %p148 = scmp.lt.s32.totalorder %s147, 15
        %s149 = scalar_select %p148, %s147, 15
        %s150 = smul.addr %s149, 4
        %s151 = scalar_lea.vmem %s0, %s150
        %p152 = pneg %p38
        %p153 = pneg %p35
        %p154 = pneg %p59
        %p155 = pneg %p56
        %p156 = pneg %p80
        %p157 = pneg %p77
        %p158 = pneg %p106
        %p159 = pneg %p103
        %s160 = sand.u32 %s93, 1
        %s161 = scalar_lea.sflag [#allocation3], %s160
        %s162 = sand.u32 %s93, 1
        %s163 = smul.addr %s162, 16
        %s164 = scalar_lea.vmem [#allocation2], %s163
        %s165 = smul.u32 4, %s17
        %p166 = scmp.lt.s32.totalorder %s165, 15
        %s167 = scalar_select %p166, %s165, 15
        %s168 = smul.addr %s167, 4
        %s169 = scalar_lea.vmem %s0, %s168
        %s170 = smul.u32 4, %s17
        %s171 = smul.u32 4, %s17
        %v173 = vld [vmem:[%s169] sm:$0xf]
        %v174 = vld [vmem:[%s169 + $0x4] sm:$0xf]
        %v175 = vld [vmem:[%s169 + $0x8] sm:$0xf]
        %v176 = vld [vmem:[%s169 + $0xc] sm:$0xf]
        %v177 = vld [vmem:[%s1] sm:$0xf]
        %v178 = vld [vmem:[%s1 + $0x4] sm:$0xf]
        %v179 = vld [vmem:[%s2] sm:$0x1]
        %v181 = vlaneseq
        %v182 = vshrl.u32 %v181, 7
        %v183 = vsub.s32 0, %v182
        %v184 = vrot.slane %v179, %v183
        %v190 = vunpack.c.l.b16 %v173
        %v191 = vunpack.c.l.b16 %v174
        %v192 = vunpack.c.l.b16 %v175
        %v193 = vunpack.c.l.b16 %v176
        %v194 = vpack.c.b16 %v191, %v190
        %v195 = vpack.c.b16 %v193, %v192
        %v198 = vunpack.c.l.b16 %v177
        %v199 = vunpack.c.l.b16 %v178
        %v200 = vpack.c.b16 %v199, %v198
        %vm202 = vcmask 130048
        %v204 = vsel %vm202, %v194, 0
        %v207 = vsel %vm202, %v195, 0
        %209 = vmatprep.subr.bf16.mxu0 0
        %210 = vmatpush1.bf16.msra.mxu0 %v200
        %211 = vmatprep.subr.bf16.mxu0 0
        %212 = vmatpush1.bf16.msra.mxu0 0
        %213 = vmatprep.subr.bf16.mxu0 0
        %214 = vmatpush1.bf16.msra.mxu0 0
        %215 = vmatprep.subr.bf16.mxu0 0
        %216 = vmatpush1.bf16.msra.mxu0 0
        %217 = vmatprep.subr.bf16.mxu0 0
        %218 = vmatpush1.bf16.msra.mxu0 0
        %219 = vmatprep.subr.bf16.mxu0 0
        %220 = vmatpush1.bf16.msra.mxu0 0
        %221 = vmatprep.subr.bf16.mxu0 0
        %222 = vmatpush1.bf16.msra.mxu0 0
        %223 = vmatprep.subr.bf16.mxu0 0
        %224 = vmatpush1.bf16.msra.mxu0 0
        %225 = vmatprep.subr.bf16.mxu0 0
        %226 = vmatpush1.bf16.msra.mxu0 0
        %227 = vmatprep.subr.bf16.mxu0 0
        %228 = vmatpush1.bf16.msra.mxu0 0
        %229 = vmatprep.subr.bf16.mxu0 0
        %230 = vmatpush1.bf16.msra.mxu0 0
        %231 = vmatprep.subr.bf16.mxu0 0
        %232 = vmatpush1.bf16.msra.mxu0 0
        %233 = vmatprep.subr.bf16.mxu0 0
        %234 = vmatpush1.bf16.msra.mxu0 0
        %235 = vmatprep.subr.bf16.mxu0 0
        %236 = vmatpush1.bf16.msra.mxu0 0
        %237 = vmatprep.subr.bf16.mxu0 0
        %238 = vmatpush1.bf16.msra.mxu0 0
        %239 = vmatprep.subr.bf16.mxu0 0
        %240 = vmatpush1.bf16.msra.mxu0 0
        %241 = vmatprep.mubr.bf16.mxu0 0
        %242 = vmatmul.mubr.bf16.gmra.mrb[0].mxu0 %v204
        %v243 = vpop.f32.mrb[0].mxu0
        %v244 = vadd.f32 %v184, %v243
        %v245 = vpop.f32.mrb[0].mxu0
        %v246 = vpop.f32.mrb[0].mxu0
        %v247 = vadd.f32 %v184, %v246
        %v248 = vpop.f32.mrb[0].mxu0
        %249 = vmatprep.mubr.bf16.mxu0 0
        %250 = vmatmul.mubr.bf16.gmra.mrb[0].mxu0 %v207
        %v251 = vpop.f32.mrb[0].mxu0
        %v252 = vadd.f32 %v184, %v251
        %v253 = vpop.f32.mrb[0].mxu0
        %v254 = vpop.f32.mrb[0].mxu0
        %v255 = vadd.f32 %v184, %v254
        %v256 = vpop.f32.mrb[0].mxu0
        %257 = vdwg.mxu0
        %v258 = vpack.c.bf16 %v247, %v244
        %v259 = vpack.c.bf16 %v255, %v252
        %v262 = vunpack.c.l.b16 %v258
        %v263 = vunpack.c.h.b16 %v258
        %v264 = vunpack.c.l.b16 %v259
        %v265 = vunpack.c.h.b16 %v259
        %v266 = vpack.c.b16 %v262, %v262
        %v267 = vpack.c.b16 %v263, %v263
        %v268 = vpack.c.b16 %v264, %v264
        %v269 = vpack.c.b16 %v265, %v265
        %274 = vst [vmem:[%s164] sm:$0xf] %v266
        %275 = vst [vmem:[%s164 + $0x4] sm:$0xf] %v267
        %276 = vst [vmem:[%s164 + $0x8] sm:$0xf] %v268
        %277 = vst [vmem:[%s164 + $0xc] sm:$0xf] %v269
        %s278 = sand.u32 %s93, 1
        %s279 = scalar_lea.sflag [#allocation3], %s278
        %s280 = sand.u32 %s93, 1
        %s281 = smul.addr %s280, 16
        %s282 = scalar_lea.vmem [#allocation2], %s281
        // Predicated region
        $region33: #{hybrid_embed_forward.1} parent=31 // pred_check
          %p283 = pneg %p103
        $region34: #{hybrid_embed_forward.1} parent=31 // pred_check_branch
          %285 = sbr.rel (%p283) target = $region36
        $region35: #{hybrid_embed_forward.1} parent=31 // pred_region
          %s286 = smul.u32 4, %s17
          %s288 = ssub.s32 256, 256
          %289 = vsyncadd %s279, %s288
          %s290 = smul.addr %s286, 64
          %s291 = scalar_lea.hbm %s3, %s290
          %s292 = sshll.u32 %s282, 4
          %s293 = int_to_ptr.vmem [resolvable:$true] %s292
          %298 = dma.vmem_to_hbm [thread:$0]  %s293, 256, %s291, %s279, 64, 64, 4
        $region36: #{hybrid_embed_forward.1} parent=31 // pred_fallthru
          _
      $region32: #{hybrid_embed_forward.1} parent=5 // pred_fallthru
        _
      %p299 = scmp.le.s32.totalorder 2, %s12
      // Predicated region
      $region37: #{hybrid_embed_forward.1} parent=5 // pred_check
        %p300 = pneg %p299
      $region38: #{hybrid_embed_forward.1} parent=5 // pred_check_branch
        %302 = sbr.rel (%p300) target = $region40
      $region39: #{hybrid_embed_forward.1} parent=5 // pred_region
        %s303 = ssub.s32 %s12, 2
        // Predicated region
        $region41: #{hybrid_embed_forward.1} parent=39 // pred_check
          %p304 = pneg %p109
        $region42: #{hybrid_embed_forward.1} parent=39 // pred_check_branch
          %306 = sbr.rel (%p304) target = $region44
        $region43: #{hybrid_embed_forward.1} parent=39 // pred_region
          %s307 = sand.u32 %s94, 1
          %s308 = scalar_lea.sflag [#allocation3], %s307
          %s309 = sand.u32 %s94, 1
          %s310 = smul.addr %s309, 16
          %s311 = scalar_lea.vmem [#allocation2], %s310
          %312 = dma.done %s308, 256
        $region44: #{hybrid_embed_forward.1} parent=39 // pred_fallthru
          _
      $region40: #{hybrid_embed_forward.1} parent=5 // pred_fallthru
        _
    $region6: #{hybrid_embed_forward.1} parent=1 // loop_footer
      %s16 = sadd.s32 1, %s12
    $region7: #{hybrid_embed_forward.1} parent=1 // loop_footer_branch
      %11 = sbr.rel target = $region3
    $region8: #{hybrid_embed_forward.1} parent=1 // loop_exit
      _
    %313 = vsyncpa [#allocation3], 1
    %s314 = scalar_lea.sflag [#allocation3], 1
    %315 = vsyncpa %s314, 1

</llo_original>
